<compile_context>
chip_gen: v7x
topology: tpu7x:2x2x1
jax: 0.10.0
libtpu: 0.0.40
codegen_flags: <defaults>
</compile_context>

<pallas_src>
import jax
import jax.numpy as jnp
from jax.experimental import pallas as pl
from jax.experimental.pallas import tpu as pltpu

FEAT = 12
TILE_B = 8192  # batch rows per grid step (multiple of 8; each (tb,12) buffer is tb*512 B in VMEM)


def mlp_kernel(x_ref, w_ref, b_ref, o_ref):
    # x_ref: (tb, 12) native layout.  Transpose once so the batch axis sits on lanes:
    # all matmuls, bias adds and ReLUs then run lane-dense on (12, tb) tiles.
    # y^T = W @ x^T + b_col  ==  (x @ W^T + b)^T, matching nn.Linear with W in (out, in).
    xT = x_ref[...].T                                                     # (12, tb)
    h = jnp.dot(w_ref[0], xT, preferred_element_type=jnp.float32) + b_ref[0]
    h = jnp.maximum(h, 0.0)
    h = jnp.dot(w_ref[1], h, preferred_element_type=jnp.float32) + b_ref[1]
    h = jnp.maximum(h, 0.0)
    yT = jnp.dot(w_ref[2], h, preferred_element_type=jnp.float32) + b_ref[2]
    o_ref[...] = yT.T.astype(o_ref.dtype)                                 # back to (tb, 12)


def prepare_params(params):
    """One-time param prep (hoisted out of the per-call path): pack the three layers.
    Weights stay in PyTorch (out, in) layout; biases become (12, 1) columns that
    broadcast over the lane (batch) axis inside the kernel."""
    w1, b1, w2, b2, w3, b3 = params
    w = jnp.stack([w1, w2, w3])                                # (3, 12, 12)
    b = jnp.stack([b1, b2, b3]).reshape(3, FEAT, 1)            # (3, 12, 1)
    return w, b


@jax.jit
def mlp_forward(x, prepared):
    """x: (B, 12) float32.  prepared: output of prepare_params()."""
    w, b = prepared
    B = x.shape[0]

    if B <= TILE_B:
        tb = B                       # single block == full array dims (valid BlockSpec)
    else:
        tb = TILE_B                  # multiple of 8; ragged last block is masked by Pallas
    grid = (pl.cdiv(B, tb),)

    const3 = lambda i: (0, 0, 0)

    return pl.pallas_call(
        mlp_kernel,
        out_shape=jax.ShapeDtypeStruct((B, FEAT), jnp.float32),
        grid_spec=pltpu.PrefetchScalarGridSpec(
            num_scalar_prefetch=0,
            grid=grid,
            in_specs=[
                pl.BlockSpec((tb, FEAT), lambda i: (i, 0)),         # streamed batch tiles
                pl.BlockSpec((3, FEAT, FEAT), const3),              # packed weights (resident)
                pl.BlockSpec((3, FEAT, 1), const3),                 # packed biases  (resident)
            ],
            out_specs=pl.BlockSpec((tb, FEAT), lambda i: (i, 0)),
        ),
        compiler_params=pltpu.CompilerParams(
            # Independent batch tiles: v7x can shard grid steps across both TensorCores;
            # harmless on single-TC v5e/v6e.  Explicit VMEM limit gives headroom for the
            # lane-padded (tb,12) buffers on every generation.
            dimension_semantics=("parallel",),
            vmem_limit_bytes=32 * 1024 * 1024,
        ),
        cost_estimate=pl.CostEstimate(
            flops=6 * FEAT * FEAT * B,                    # 3 matmuls x 2*B*12*12
            transcendentals=0,
            bytes_accessed=2 * 4 * FEAT * B + 3 * (FEAT * FEAT + FEAT) * 4,
        ),
    )(x, w, b)


def init_params(key):
    # nn.Linear shapes: W (out, in) = (12, 12), b (12,), U(-1/sqrt(in), 1/sqrt(in)) init.
    ks = jax.random.split(key, 6)
    bound = 1.0 / jnp.sqrt(FEAT)
    w1 = jax.random.uniform(ks[0], (FEAT, FEAT), jnp.float32, -bound, bound)
    b1 = jax.random.uniform(ks[1], (FEAT,), jnp.float32, -bound, bound)
    w2 = jax.random.uniform(ks[2], (FEAT, FEAT), jnp.float32, -bound, bound)
    b2 = jax.random.uniform(ks[3], (FEAT,), jnp.float32, -bound, bound)
    w3 = jax.random.uniform(ks[4], (FEAT, FEAT), jnp.float32, -bound, bound)
    b3 = jax.random.uniform(ks[5], (FEAT,), jnp.float32, -bound, bound)
    return (w1, b1, w2, b2, w3, b3)


def reference_forward(x, params):
    w1, b1, w2, b2, w3, b3 = params
    h = jnp.maximum(x @ w1.T + b1, 0.0)
    h = jnp.maximum(h @ w2.T + b2, 0.0)
    return h @ w3.T + b3


if __name__ == "__main__":
    key = jax.random.PRNGKey(0)
    kx, kx2, kp = jax.random.split(key, 3)
    params = init_params(kp)
    prepared = prepare_params(params)

    # Primary small demo (matches the module's natural (B, 12) input).
    B = 8
    x = jax.random.normal(kx, (B, FEAT), jnp.float32)
    out = jax.block_until_ready(mlp_forward(x, prepared))
    ref = reference_forward(x, params)
    assert out.shape == (B, FEAT)
    assert jnp.allclose(out, ref, atol=1e-5, rtol=1e-5), "mismatch vs reference (B=8)"

    # Sanity check of the multi-tile path with a ragged last block (B not a TILE_B multiple).
    B2 = 20000
    x2 = jax.random.normal(kx2, (B2, FEAT), jnp.float32)
    out2 = jax.block_until_ready(mlp_forward(x2, prepared))
    ref2 = reference_forward(x2, params)
    assert out2.shape == (B2, FEAT)
    assert jnp.allclose(out2, ref2, atol=1e-5, rtol=1e-5), "mismatch vs reference (B=20000)"

    print("KERNEL_OK")
</pallas_src>

<mosaic_0001>
module attributes {stable_mosaic.version = 11 : i64} {
  func.func @mlp_kernel(%arg0: i32, %arg1: memref<8x12xf32, #tpu.memory_space<vmem>>, %arg2: memref<3x12x12xf32, #tpu.memory_space<vmem>>, %arg3: memref<3x12x1xf32, #tpu.memory_space<vmem>>, %arg4: memref<8x12xf32, #tpu.memory_space<vmem>>) attributes {dimension_semantics = [#tpu.dimension_semantics<parallel>], iteration_bounds = array<i64: 1>, scalar_prefetch = 0 : i64, scratch_operands = 0 : i64, tpu.core_type = #tpu.core_type<tc>, window_params = [{transform_indices = @transform_0, window_bounds = array<i64: 8, 12>}, {pipeline_mode = #tpu.pipeline_mode<synchronous>, transform_indices = @transform_1, window_bounds = array<i64: 3, 12, 12>}, {pipeline_mode = #tpu.pipeline_mode<synchronous>, transform_indices = @transform_2, window_bounds = array<i64: 3, 12, 1>}, {transform_indices = @transform_3, window_bounds = array<i64: 8, 12>}]} {
    %c0 = arith.constant 0 : index
    %c0_0 = arith.constant 0 : index
    %0 = vector.load %arg1[%c0, %c0_0] : memref<8x12xf32, #tpu.memory_space<vmem>>, vector<8x12xf32>
    %1 = tpu.transpose %0, [1, 0] : vector<8x12xf32> -> vector<12x8xf32>
    %c0_1 = arith.constant 0 : index
    %c0_2 = arith.constant 0 : index
    %c0_3 = arith.constant 0 : index
    %2 = vector.load %arg2[%c0_1, %c0_2, %c0_3] : memref<3x12x12xf32, #tpu.memory_space<vmem>>, vector<1x12x12xf32>
    %3 = vector.shape_cast %2 : vector<1x12x12xf32> to vector<12x12xf32>
    %cst = arith.constant dense<0.000000e+00> : vector<12x8xf32>
    %4 = tpu.matmul %3, %1, %cst {dimension_numbers = #tpu.dot_dimension_numbers<[1], [0], [0], [1], [0, 0, 1, 1], [], []>} : vector<12x12xf32>, vector<12x8xf32>, vector<12x8xf32> -> vector<12x8xf32>
    %c0_4 = arith.constant 0 : index
    %c0_5 = arith.constant 0 : index
    %c0_6 = arith.constant 0 : index
    %5 = vector.load %arg3[%c0_4, %c0_5, %c0_6] : memref<3x12x1xf32, #tpu.memory_space<vmem>>, vector<1x12x1xf32>
    %6 = vector.shape_cast %5 : vector<1x12x1xf32> to vector<12x1xf32>
    %7 = vector.broadcast %6 : vector<12x1xf32> to vector<12x8xf32>
    %8 = arith.addf %4, %7 : vector<12x8xf32>
    %cst_7 = arith.constant 0.000000e+00 : f32
    %9 = vector.broadcast %cst_7 : f32 to vector<12x8xf32>
    %10 = arith.maximumf %8, %9 : vector<12x8xf32>
    %c1 = arith.constant 1 : index
    %c0_8 = arith.constant 0 : index
    %c0_9 = arith.constant 0 : index
    %11 = vector.load %arg2[%c1, %c0_8, %c0_9] : memref<3x12x12xf32, #tpu.memory_space<vmem>>, vector<1x12x12xf32>
    %12 = vector.shape_cast %11 : vector<1x12x12xf32> to vector<12x12xf32>
    %cst_10 = arith.constant dense<0.000000e+00> : vector<12x8xf32>
    %13 = tpu.matmul %12, %10, %cst_10 {dimension_numbers = #tpu.dot_dimension_numbers<[1], [0], [0], [1], [0, 0, 1, 1], [], []>} : vector<12x12xf32>, vector<12x8xf32>, vector<12x8xf32> -> vector<12x8xf32>
    %c1_11 = arith.constant 1 : index
    %c0_12 = arith.constant 0 : index
    %c0_13 = arith.constant 0 : index
    %14 = vector.load %arg3[%c1_11, %c0_12, %c0_13] : memref<3x12x1xf32, #tpu.memory_space<vmem>>, vector<1x12x1xf32>
    %15 = vector.shape_cast %14 : vector<1x12x1xf32> to vector<12x1xf32>
    %16 = vector.broadcast %15 : vector<12x1xf32> to vector<12x8xf32>
    %17 = arith.addf %13, %16 : vector<12x8xf32>
    %cst_14 = arith.constant 0.000000e+00 : f32
    %18 = vector.broadcast %cst_14 : f32 to vector<12x8xf32>
    %19 = arith.maximumf %17, %18 : vector<12x8xf32>
    %c2 = arith.constant 2 : index
    %c0_15 = arith.constant 0 : index
    %c0_16 = arith.constant 0 : index
    %20 = vector.load %arg2[%c2, %c0_15, %c0_16] : memref<3x12x12xf32, #tpu.memory_space<vmem>>, vector<1x12x12xf32>
    %21 = vector.shape_cast %20 : vector<1x12x12xf32> to vector<12x12xf32>
    %cst_17 = arith.constant dense<0.000000e+00> : vector<12x8xf32>
    %22 = tpu.matmul %21, %19, %cst_17 {dimension_numbers = #tpu.dot_dimension_numbers<[1], [0], [0], [1], [0, 0, 1, 1], [], []>} : vector<12x12xf32>, vector<12x8xf32>, vector<12x8xf32> -> vector<12x8xf32>
    %c2_18 = arith.constant 2 : index
    %c0_19 = arith.constant 0 : index
    %c0_20 = arith.constant 0 : index
    %23 = vector.load %arg3[%c2_18, %c0_19, %c0_20] : memref<3x12x1xf32, #tpu.memory_space<vmem>>, vector<1x12x1xf32>
    %24 = vector.shape_cast %23 : vector<1x12x1xf32> to vector<12x1xf32>
    %25 = vector.broadcast %24 : vector<12x1xf32> to vector<12x8xf32>
    %26 = arith.addf %22, %25 : vector<12x8xf32>
    %27 = tpu.transpose %26, [1, 0] : vector<12x8xf32> -> vector<8x12xf32>
    %c0_21 = arith.constant 0 : index
    %c0_22 = arith.constant 0 : index
    %28 = vector.load %arg4[%c0_21, %c0_22] : memref<8x12xf32, #tpu.memory_space<vmem>>, vector<8x12xf32>
    tpu.vector_store %arg4[%c0_21, %c0_22], %27 {strides = array<i32>} : memref<8x12xf32, #tpu.memory_space<vmem>>, vector<8x12xf32>,
    return
  }
  func.func @transform_0(%arg0: i32) -> (i32, i32) {
    %c0_i32 = arith.constant 0 : i32
    %c0_i32_0 = arith.constant 0 : i32
    return %arg0, %c0_i32 : i32, i32
  }
  func.func @transform_1(%arg0: i32) -> (i32, i32, i32) {
    %c0_i32 = arith.constant 0 : i32
    %c0_i32_0 = arith.constant 0 : i32
    %c0_i32_1 = arith.constant 0 : i32
    %c0_i32_2 = arith.constant 0 : i32
    return %c0_i32, %c0_i32_0, %c0_i32_1 : i32, i32, i32
  }
  func.func @transform_2(%arg0: i32) -> (i32, i32, i32) {
    %c0_i32 = arith.constant 0 : i32
    %c0_i32_0 = arith.constant 0 : i32
    %c0_i32_1 = arith.constant 0 : i32
    %c0_i32_2 = arith.constant 0 : i32
    return %c0_i32, %c0_i32_0, %c0_i32_1 : i32, i32, i32
  }
  func.func @transform_3(%arg0: i32) -> (i32, i32) {
    %c0_i32 = arith.constant 0 : i32
    %c0_i32_0 = arith.constant 0 : i32
    return %arg0, %c0_i32 : i32, i32
  }
}

</mosaic_0001>

<llo_original>
// kernel: mlp_forward.1
$region0: #{mlp_forward.1}
  #allocation0 [shape = 'u32[]', space=smem, size = 0x4, offset = 0x4, fixed_abs, tag = 'smem constant byte address 0x4 - core index']
  #allocation1 [shape = 'u32[144,128]{1,0:T(1,128)}', space=vmem, size = 0x12000, scoped, tag = 'internal scratch']
  %s0 = inlined_call_operand.hbm [shape: f32[8,12], index: 0, kind: input, shape index: {}]
  %s1 = inlined_call_operand.vmem [shape: f32[3,12,12], index: 1, kind: input, shape index: {}]
  %s2 = inlined_call_operand.vmem [shape: f32[3,12,1], index: 2, kind: input, shape index: {}]
  %s3 = inlined_call_operand.hbm [shape: f32[8,12], index: 3, kind: output, shape index: {}]
  %s4 = sld [smem:[#allocation0]]
  $region26: #{mlp_forward.1} parent=0
    _
  %s6 = ssub.s32 1, %s4
  %s7 = scalar_select 0, %s6, %s4
  $region1: #{mlp_forward.1} parent=0
    #allocation2 [shape = 'u8[4096]{0}', space=vmem, size = 0x1000, scoped, tag = 'input window, operand 0, single buffered']
    #allocation3 [shape = 's32[1]{0}', space=sflag, size = 0x4, scoped, tag = 'scoped memory for mlp_forward.1']
    #allocation4 [shape = 's32[1]{0}', space=sflag, size = 0x4, scoped, tag = 'scoped memory for mlp_forward.1']
    #allocation5 [shape = 'u8[4096]{0}', space=vmem, size = 0x1000, scoped, tag = 'output window, operand 0, single buffered']
    %8 = vsyncpa [#allocation3], 0
    %9 = vsyncpa [#allocation4], 0
    // Predicated region
    $region2: #{mlp_forward.1} parent=1 // pred_check
      _
    $region3: #{mlp_forward.1} parent=1 // pred_check_branch
      %11 = sbr.rel (0) target = $region5
    $region4: #{mlp_forward.1} parent=1 // pred_region
      %s13 = ssub.s32 128, 128
      %14 = vsyncadd [#allocation3], %s13
      %s16 = sshll.u32 [#allocation2], 4
      %s17 = int_to_ptr.vmem [resolvable:$true] %s16
      %19 = dma.hbm_to_vmem [thread:$0]  %s0, 128, %s17, [#allocation3]
    $region5: #{mlp_forward.1} parent=1 // pred_fallthru
      _
    // Predicated region
    $region6: #{mlp_forward.1} parent=1 // pred_check
      _
    $region7: #{mlp_forward.1} parent=1 // pred_check_branch
      %21 = sbr.rel (0) target = $region9
    $region8: #{mlp_forward.1} parent=1 // pred_region
      _
    $region9: #{mlp_forward.1} parent=1 // pred_fallthru
      _
    // Predicated region
    $region10: #{mlp_forward.1} parent=1 // pred_check
      _
    $region11: #{mlp_forward.1} parent=1 // pred_check_branch
      %23 = sbr.rel (0) target = $region13
    $region12: #{mlp_forward.1} parent=1 // pred_region
      _
    $region13: #{mlp_forward.1} parent=1 // pred_fallthru
      _
    // Predicated region
    $region14: #{mlp_forward.1} parent=1 // pred_check
      _
    $region15: #{mlp_forward.1} parent=1 // pred_check_branch
      %25 = sbr.rel (0) target = $region17
    $region16: #{mlp_forward.1} parent=1 // pred_region
      %26 = dma.done [#allocation3], 128
    $region17: #{mlp_forward.1} parent=1 // pred_fallthru
      _
    %v27 = vld [vmem:[#allocation2] sm:$0xff]
    %v28 = vld [vmem:[%s1] sm:$0xff]
    %v29 = vld [vmem:[%s1 + $0x8] sm:$0xf]
    %v30 = vld [vmem:[%s2] sm:$0xff]
    %v31 = vld [vmem:[%s2 + $0x8] sm:$0xf]
    %33 = vset.pattern.permute.xlu0 0
    %34 = vperm.xlu0 %33, %v30
    %v35 = vpop.permute.xlu0 %34
    %38 = vset.pattern.permute.xlu0 0
    %39 = vperm.xlu0 %38, %v31
    %v40 = vpop.permute.xlu0 %39
    %vm42 = vcmask 97280
    %v44 = vsel %vm42, %v28, 0
    %v47 = vsel %vm42, %v29, 0
    %v50 = vsel %vm42, %v27, 0
    %52 = vmatprep.subr.mxu0 0.0
    %53 = vmatpush1.xpose.msra.mxu0 %v50
    %54 = vmatprep.subr.mxu0 0.0
    %55 = vmatpush1.xpose.msra.mxu0 0.0
    %56 = vmatprep.subr.mxu0 0.0
    %57 = vmatpush1.xpose.msra.mxu0 0.0
    %58 = vmatprep.subr.mxu0 0.0
    %59 = vmatpush1.xpose.msra.mxu0 0.0
    %60 = vmatprep.subr.mxu0 0.0
    %61 = vmatpush1.xpose.msra.mxu0 0.0
    %62 = vmatprep.subr.mxu0 0.0
    %63 = vmatpush1.xpose.msra.mxu0 0.0
    %64 = vmatprep.subr.mxu0 0.0
    %65 = vmatpush1.xpose.msra.mxu0 0.0
    %66 = vmatprep.subr.mxu0 0.0
    %67 = vmatpush1.xpose.msra.mxu0 0.0
    %68 = vmatprep.subr.mxu0 0.0
    %69 = vmatpush1.xpose.msra.mxu0 0.0
    %70 = vmatprep.subr.mxu0 0.0
    %71 = vmatpush1.xpose.msra.mxu0 0.0
    %72 = vmatprep.subr.mxu0 0.0
    %73 = vmatpush1.xpose.msra.mxu0 0.0
    %74 = vmatprep.subr.mxu0 0.0
    %75 = vmatpush1.xpose.msra.mxu0 0.0
    %76 = vmatprep.subr.mxu0 0.0
    %77 = vmatpush1.xpose.msra.mxu0 0.0
    %78 = vmatprep.subr.mxu0 0.0
    %79 = vmatpush1.xpose.msra.mxu0 0.0
    %80 = vmatprep.subr.mxu0 0.0
    %81 = vmatpush1.xpose.msra.mxu0 0.0
    %82 = vmatprep.subr.mxu0 0.0
    %83 = vmatpush1.xpose.msra.mxu0 0.0
    %84 = vmatprep.subr.mxu0 0.0
    %85 = vmatpush1.xpose.msra.mxu0 0.0
    %86 = vmatprep.subr.mxu0 0.0
    %87 = vmatpush1.xpose.msra.mxu0 0.0
    %88 = vmatprep.subr.mxu0 0.0
    %89 = vmatpush1.xpose.msra.mxu0 0.0
    %90 = vmatprep.subr.mxu0 0.0
    %91 = vmatpush1.xpose.msra.mxu0 0.0
    %92 = vmatprep.subr.mxu0 0.0
    %93 = vmatpush1.xpose.msra.mxu0 0.0
    %94 = vmatprep.subr.mxu0 0.0
    %95 = vmatpush1.xpose.msra.mxu0 0.0
    %96 = vmatprep.subr.mxu0 0.0
    %97 = vmatpush1.xpose.msra.mxu0 0.0
    %98 = vmatprep.subr.mxu0 0.0
    %99 = vmatpush1.xpose.msra.mxu0 0.0
    %100 = vmatprep.subr.mxu0 0.0
    %101 = vmatpush1.xpose.msra.mxu0 0.0
    %102 = vmatprep.subr.mxu0 0.0
    %103 = vmatpush1.xpose.msra.mxu0 0.0
    %104 = vmatprep.subr.mxu0 0.0
    %105 = vmatpush1.xpose.msra.mxu0 0.0
    %106 = vmatprep.subr.mxu0 0.0
    %107 = vmatpush1.xpose.msra.mxu0 0.0
    %108 = vmatprep.subr.mxu0 0.0
    %109 = vmatpush1.xpose.msra.mxu0 0.0
    %110 = vmatprep.subr.mxu0 0.0
    %111 = vmatpush1.xpose.msra.mxu0 0.0
    %112 = vmatprep.subr.mxu0 0.0
    %113 = vmatpush1.xpose.msra.mxu0 0.0
    %114 = vmatprep.subr.mxu0 0.0
    %115 = vmatpush1.xpose.msra.mxu0 0.0
    %116 = vmatprep.mubr.f32.mxu0 0.0
    %117 = vmatmul.mubr.f32.gmra.mrb[0].mxu0 %v44
    %v118 = vpop.f32.mrb[0].mxu0
    %v119 = vadd.f32 %v35, %v118
    %v120 = vpop.f32.mrb[0].mxu0
    %121 = vmatprep.mubr.f32.mxu0 0.0
    %122 = vmatmul.mubr.f32.gmra.mrb[0].mxu0 %v47
    %v123 = vpop.f32.mrb[0].mxu0
    %v124 = vadd.f32 %v40, %v123
    %v125 = vpop.f32.mrb[0].mxu0
    %126 = vdwg.mxu0
    %v127 = vmax.f32 %v119, 0.0
    %v128 = vmax.f32 %v124, 0.0
    %s129 = scalar_lea.vmem %s1, 16
    %v130 = vld [vmem:[%s129] sm:$0xff]
    %v131 = vld [vmem:[%s129 + $0x8] sm:$0xf]
    %s132 = scalar_lea.vmem %s2, 16
    %v133 = vld [vmem:[%s132] sm:$0xff]
    %v134 = vld [vmem:[%s132 + $0x8] sm:$0xf]
    %136 = vset.pattern.permute.xlu0 0
    %137 = vperm.xlu0 %136, %v133
    %v138 = vpop.permute.xlu0 %137
    %141 = vset.pattern.permute.xlu0 0
    %142 = vperm.xlu0 %141, %v134
    %v143 = vpop.permute.xlu0 %142
    %v146 = vsel %vm42, %v130, 0
    %v149 = vsel %vm42, %v131, 0
    %vm151 = vcmask 1043456
    %v153 = vsel %vm151, %v128, 0
    %155 = vmatprep.subr.mxu0 0.0
    %156 = vmatpush1.msra.mxu0 %v127
    %157 = vmatprep.subr.mxu0 0.0
    %158 = vmatpush1.msra.mxu0 %v153
    %159 = vmatprep.subr.mxu0 0.0
    %160 = vmatpush1.msra.mxu0 0.0
    %161 = vmatprep.subr.mxu0 0.0
    %162 = vmatpush1.msra.mxu0 0.0
    %163 = vmatprep.subr.mxu0 0.0
    %164 = vmatpush1.msra.mxu0 0.0
    %165 = vmatprep.subr.mxu0 0.0
    %166 = vmatpush1.msra.mxu0 0.0
    %167 = vmatprep.subr.mxu0 0.0
    %168 = vmatpush1.msra.mxu0 0.0
    %169 = vmatprep.subr.mxu0 0.0
    %170 = vmatpush1.msra.mxu0 0.0
    %171 = vmatprep.subr.mxu0 0.0
    %172 = vmatpush1.msra.mxu0 0.0
    %173 = vmatprep.subr.mxu0 0.0
    %174 = vmatpush1.msra.mxu0 0.0
    %175 = vmatprep.subr.mxu0 0.0
    %176 = vmatpush1.msra.mxu0 0.0
    %177 = vmatprep.subr.mxu0 0.0
    %178 = vmatpush1.msra.mxu0 0.0
    %179 = vmatprep.subr.mxu0 0.0
    %180 = vmatpush1.msra.mxu0 0.0
    %181 = vmatprep.subr.mxu0 0.0
    %182 = vmatpush1.msra.mxu0 0.0
    %183 = vmatprep.subr.mxu0 0.0
    %184 = vmatpush1.msra.mxu0 0.0
    %185 = vmatprep.subr.mxu0 0.0
    %186 = vmatpush1.msra.mxu0 0.0
    %187 = vmatprep.subr.mxu0 0.0
    %188 = vmatpush1.msra.mxu0 0.0
    %189 = vmatprep.subr.mxu0 0.0
    %190 = vmatpush1.msra.mxu0 0.0
    %191 = vmatprep.subr.mxu0 0.0
    %192 = vmatpush1.msra.mxu0 0.0
    %193 = vmatprep.subr.mxu0 0.0
    %194 = vmatpush1.msra.mxu0 0.0
    %195 = vmatprep.subr.mxu0 0.0
    %196 = vmatpush1.msra.mxu0 0.0
    %197 = vmatprep.subr.mxu0 0.0
    %198 = vmatpush1.msra.mxu0 0.0
    %199 = vmatprep.subr.mxu0 0.0
    %200 = vmatpush1.msra.mxu0 0.0
    %201 = vmatprep.subr.mxu0 0.0
    %202 = vmatpush1.msra.mxu0 0.0
    %203 = vmatprep.subr.mxu0 0.0
    %204 = vmatpush1.msra.mxu0 0.0
    %205 = vmatprep.subr.mxu0 0.0
    %206 = vmatpush1.msra.mxu0 0.0
    %207 = vmatprep.subr.mxu0 0.0
    %208 = vmatpush1.msra.mxu0 0.0
    %209 = vmatprep.subr.mxu0 0.0
    %210 = vmatpush1.msra.mxu0 0.0
    %211 = vmatprep.subr.mxu0 0.0
    %212 = vmatpush1.msra.mxu0 0.0
    %213 = vmatprep.subr.mxu0 0.0
    %214 = vmatpush1.msra.mxu0 0.0
    %215 = vmatprep.subr.mxu0 0.0
    %216 = vmatpush1.msra.mxu0 0.0
    %217 = vmatprep.subr.mxu0 0.0
    %218 = vmatpush1.msra.mxu0 0.0
    %219 = vmatprep.mubr.f32.mxu0 0.0
    %220 = vmatmul.mubr.f32.gmra.mrb[0].mxu0 %v146
    %v221 = vpop.f32.mrb[0].mxu0
    %v222 = vadd.f32 %v138, %v221
    %v223 = vpop.f32.mrb[0].mxu0
    %224 = vmatprep.mubr.f32.mxu0 0.0
    %225 = vmatmul.mubr.f32.gmra.mrb[0].mxu0 %v149
    %v226 = vpop.f32.mrb[0].mxu0
    %v227 = vadd.f32 %v143, %v226
    %v228 = vpop.f32.mrb[0].mxu0
    %229 = vdwg.mxu0
    %v230 = vmax.f32 %v222, 0.0
    %v231 = vmax.f32 %v227, 0.0
    %s232 = scalar_lea.vmem %s1, 32
    %v233 = vld [vmem:[%s232] sm:$0xff]
    %v234 = vld [vmem:[%s232 + $0x8] sm:$0xf]
    %s235 = scalar_lea.vmem %s2, 32
    %v236 = vld [vmem:[%s235] sm:$0xff]
    %v237 = vld [vmem:[%s235 + $0x8] sm:$0xf]
    %239 = vset.pattern.permute.xlu0 0
    %240 = vperm.xlu0 %239, %v236
    %v241 = vpop.permute.xlu0 %240
    %244 = vset.pattern.permute.xlu0 0
    %245 = vperm.xlu0 %244, %v237
    %v246 = vpop.permute.xlu0 %245
    %v249 = vsel %vm42, %v233, 0
    %v252 = vsel %vm42, %v234, 0
    %v255 = vsel %vm151, %v231, 0
    %257 = vmatprep.subr.mxu0 0.0
    %258 = vmatpush1.msra.mxu0 %v230
    %259 = vmatprep.subr.mxu0 0.0
    %260 = vmatpush1.msra.mxu0 %v255
    %261 = vmatprep.subr.mxu0 0.0
    %262 = vmatpush1.msra.mxu0 0.0
    %263 = vmatprep.subr.mxu0 0.0
    %264 = vmatpush1.msra.mxu0 0.0
    %265 = vmatprep.subr.mxu0 0.0
    %266 = vmatpush1.msra.mxu0 0.0
    %267 = vmatprep.subr.mxu0 0.0
    %268 = vmatpush1.msra.mxu0 0.0
    %269 = vmatprep.subr.mxu0 0.0
    %270 = vmatpush1.msra.mxu0 0.0
    %271 = vmatprep.subr.mxu0 0.0
    %272 = vmatpush1.msra.mxu0 0.0
    %273 = vmatprep.subr.mxu0 0.0
    %274 = vmatpush1.msra.mxu0 0.0
    %275 = vmatprep.subr.mxu0 0.0
    %276 = vmatpush1.msra.mxu0 0.0
    %277 = vmatprep.subr.mxu0 0.0
    %278 = vmatpush1.msra.mxu0 0.0
    %279 = vmatprep.subr.mxu0 0.0
    %280 = vmatpush1.msra.mxu0 0.0
    %281 = vmatprep.subr.mxu0 0.0
    %282 = vmatpush1.msra.mxu0 0.0
    %283 = vmatprep.subr.mxu0 0.0
    %284 = vmatpush1.msra.mxu0 0.0
    %285 = vmatprep.subr.mxu0 0.0
    %286 = vmatpush1.msra.mxu0 0.0
    %287 = vmatprep.subr.mxu0 0.0
    %288 = vmatpush1.msra.mxu0 0.0
    %289 = vmatprep.subr.mxu0 0.0
    %290 = vmatpush1.msra.mxu0 0.0
    %291 = vmatprep.subr.mxu0 0.0
    %292 = vmatpush1.msra.mxu0 0.0
    %293 = vmatprep.subr.mxu0 0.0
    %294 = vmatpush1.msra.mxu0 0.0
    %295 = vmatprep.subr.mxu0 0.0
    %296 = vmatpush1.msra.mxu0 0.0
    %297 = vmatprep.subr.mxu0 0.0
    %298 = vmatpush1.msra.mxu0 0.0
    %299 = vmatprep.subr.mxu0 0.0
    %300 = vmatpush1.msra.mxu0 0.0
    %301 = vmatprep.subr.mxu0 0.0
    %302 = vmatpush1.msra.mxu0 0.0
    %303 = vmatprep.subr.mxu0 0.0
    %304 = vmatpush1.msra.mxu0 0.0
    %305 = vmatprep.subr.mxu0 0.0
    %306 = vmatpush1.msra.mxu0 0.0
    %307 = vmatprep.subr.mxu0 0.0
    %308 = vmatpush1.msra.mxu0 0.0
    %309 = vmatprep.subr.mxu0 0.0
    %310 = vmatpush1.msra.mxu0 0.0
    %311 = vmatprep.subr.mxu0 0.0
    %312 = vmatpush1.msra.mxu0 0.0
    %313 = vmatprep.subr.mxu0 0.0
    %314 = vmatpush1.msra.mxu0 0.0
    %315 = vmatprep.subr.mxu0 0.0
    %316 = vmatpush1.msra.mxu0 0.0
    %317 = vmatprep.subr.mxu0 0.0
    %318 = vmatpush1.msra.mxu0 0.0
    %319 = vmatprep.subr.mxu0 0.0
    %320 = vmatpush1.msra.mxu0 0.0
    %321 = vmatprep.mubr.f32.mxu0 0.0
    %322 = vmatmul.mubr.f32.gmra.mrb[0].mxu0 %v249
    %v323 = vpop.f32.mrb[0].mxu0
    %v324 = vadd.f32 %v241, %v323
    %v325 = vpop.f32.mrb[0].mxu0
    %326 = vmatprep.mubr.f32.mxu0 0.0
    %327 = vmatmul.mubr.f32.gmra.mrb[0].mxu0 %v252
    %v328 = vpop.f32.mrb[0].mxu0
    %v329 = vadd.f32 %v246, %v328
    %v330 = vpop.f32.mrb[0].mxu0
    %331 = vdwg.mxu0
    %332 = vxpose.xlu0.b32.start [1/16] %v324, 128
    %333 = vxpose.xlu0.b32.cont [2/16] %v329, 128
    %334 = vxpose.xlu0.b32.cont [3/16] 0.0, 128
    %335 = vxpose.xlu0.b32.cont [4/16] 0.0, 128
    %336 = vxpose.xlu0.b32.cont [5/16] 0.0, 128
    %337 = vxpose.xlu0.b32.cont [6/16] 0.0, 128
    %338 = vxpose.xlu0.b32.cont [7/16] 0.0, 128
    %339 = vxpose.xlu0.b32.cont [8/16] 0.0, 128
    %340 = vxpose.xlu0.b32.cont [9/16] 0.0, 128
    %341 = vxpose.xlu0.b32.cont [10/16] 0.0, 128
    %342 = vxpose.xlu0.b32.cont [11/16] 0.0, 128
    %343 = vxpose.xlu0.b32.cont [12/16] 0.0, 128
    %344 = vxpose.xlu0.b32.cont [13/16] 0.0, 128
    %345 = vxpose.xlu0.b32.cont [14/16] 0.0, 128
    %346 = vxpose.xlu0.b32.cont [15/16] 0.0, 128
    %347 = vxpose.xlu0.b32.end [16/16] 0.0, 128
    %v348 = vpop.trf.xlu0
    %v349 = vpop.trf.xlu0
    %v350 = vpop.trf.xlu0
    %v351 = vpop.trf.xlu0
    %v352 = vpop.trf.xlu0
    %v353 = vpop.trf.xlu0
    %v354 = vpop.trf.xlu0
    %v355 = vpop.trf.xlu0
    %v356 = vpop.trf.xlu0
    %v357 = vpop.trf.xlu0
    %v358 = vpop.trf.xlu0
    %v359 = vpop.trf.xlu0
    %v360 = vpop.trf.xlu0
    %v361 = vpop.trf.xlu0
    %v362 = vpop.trf.xlu0
    %v363 = vpop.trf.xlu0
    %364 = vst.msk [vmem:[#allocation5] sm:$0xff] %vm42, %v348
    // Predicated region
    $region18: #{mlp_forward.1} parent=1 // pred_check
      _
    $region19: #{mlp_forward.1} parent=1 // pred_check_branch
      %366 = sbr.rel (0) target = $region21
    $region20: #{mlp_forward.1} parent=1 // pred_region
      %s368 = ssub.s32 128, 128
      %369 = vsyncadd [#allocation4], %s368
      %s371 = sshll.u32 [#allocation5], 4
      %s372 = int_to_ptr.vmem [resolvable:$true] %s371
      %374 = dma.vmem_to_hbm [thread:$0]  %s372, 128, %s3, [#allocation4]
    $region21: #{mlp_forward.1} parent=1 // pred_fallthru
      _
    // Predicated region
    $region22: #{mlp_forward.1} parent=1 // pred_check
      _
    $region23: #{mlp_forward.1} parent=1 // pred_check_branch
      %376 = sbr.rel (0) target = $region25
    $region24: #{mlp_forward.1} parent=1 // pred_region
      %377 = dma.done [#allocation4], 128
    $region25: #{mlp_forward.1} parent=1 // pred_fallthru
      _
    %378 = vsyncpa [#allocation3], 1
    %379 = vsyncpa [#allocation4], 1

</llo_original>
